<compile_context>
chip_gen: v7x
topology: tpu7x:2x2x1
jax: 0.10.0
libtpu: 0.0.40
codegen_flags: <defaults>
</compile_context>

<pallas_src>
import math
import functools

import jax
import jax.numpy as jnp
from jax import lax
from jax.experimental import pallas as pl
from jax.experimental.pallas import tpu as pltpu


def _transform_kernel(x_ref, w_ref, b_ref, g_ref, beta_ref, o_ref, *, eps):
    # x_ref:    (TN, H)  input row tile (native dtype)
    # w_ref:    (E, H)   dense weight, PyTorch layout (native dtype)
    # b_ref:    (1, E)   dense bias
    # g_ref:    (1, E)   LayerNorm weight (gamma)
    # beta_ref: (1, E)   LayerNorm bias  (beta)
    # o_ref:    (TN, E)  output row tile

    # dense: x @ W^T  -- contract dim 1 of x with dim 1 of W; MXU with f32 acc.
    h = lax.dot_general(
        x_ref[...], w_ref[...],
        dimension_numbers=(((1,), (1,)), ((), ())),
        preferred_element_type=jnp.float32,
    )
    h = h + b_ref[...].astype(jnp.float32)

    # gelu (exact erf form, matches the reference `gelu`); erf runs on the EUP.
    h = h * 0.5 * (1.0 + lax.erf(h * (1.0 / math.sqrt(2.0))))

    # LayerNorm over the embedding axis (biased variance, eps inside rsqrt,
    # matching torch.nn.LayerNorm). Single centered pass, sums instead of two
    # jnp.mean calls to cut XLU traffic; rsqrt goes to the EUP slot.
    inv_e = 1.0 / h.shape[-1]
    mean = jnp.sum(h, axis=-1, keepdims=True) * inv_e
    centered = h - mean
    var = jnp.sum(centered * centered, axis=-1, keepdims=True) * inv_e
    inv = lax.rsqrt(var + eps)

    out = (centered * inv) * g_ref[...].astype(jnp.float32) \
        + beta_ref[...].astype(jnp.float32)
    o_ref[...] = out.astype(o_ref.dtype)


def _choose_row_tile(hidden, embedding, in_dtype, out_dtype,
                     vmem_budget=24 * 1024 * 1024):
    """Largest row tile (multiple of 256, in [256, 2048]) fitting the budget."""
    in_b = jnp.dtype(in_dtype).itemsize
    out_b = jnp.dtype(out_dtype).itemsize
    # Resident once: weight + bias/gamma/beta.
    resident = embedding * hidden * in_b + 3 * embedding * in_b
    # Per row of the tile: double-buffered x row, double-buffered out row,
    # plus a handful of f32 (TN, E) intermediates (h / centered / out).
    per_row = 2 * hidden * in_b + 2 * embedding * out_b + 6 * embedding * 4
    avail = max(vmem_budget - resident, per_row * 256)
    tile = int(avail // per_row)
    tile = max(256, min(2048, (tile // 256) * 256))
    return tile


def albert_prediction_head_transform(x, weight, bias, ln_weight, ln_bias,
                                     eps=1e-12, row_tile=None):
    """x: (..., hidden). weight: (embedding, hidden) PyTorch nn.Linear layout."""
    *lead, hidden = x.shape
    embedding = weight.shape[0]
    n = 1
    for d in lead:
        n *= d

    x2 = x.reshape(n, hidden)

    if row_tile is None:
        row_tile = _choose_row_tile(hidden, embedding, x.dtype, x.dtype)

    # Row tile: multiple of 256 for production shapes; small inputs use a
    # single full block (block_shape == array shape satisfies tiling rules).
    if n <= row_tile:
        tn = n
        n_pad = n
    else:
        tn = row_tile
        n_pad = pl.cdiv(n, tn) * tn
        if n_pad != n:
            x2 = jnp.pad(x2, ((0, n_pad - n), (0, 0)))

    b2 = bias.reshape(1, embedding)
    g2 = ln_weight.reshape(1, embedding)
    be2 = ln_bias.reshape(1, embedding)

    kernel = functools.partial(_transform_kernel, eps=eps)

    out = pl.pallas_call(
        kernel,
        out_shape=jax.ShapeDtypeStruct((n_pad, embedding), x.dtype),
        grid_spec=pltpu.PrefetchScalarGridSpec(
            num_scalar_prefetch=0,
            grid=(n_pad // tn,),
            in_specs=[
                pl.BlockSpec((tn, hidden), lambda i: (i, 0)),         # x tile streams
                pl.BlockSpec((embedding, hidden), lambda i: (0, 0)),  # weight resident
                pl.BlockSpec((1, embedding), lambda i: (0, 0)),       # bias resident
                pl.BlockSpec((1, embedding), lambda i: (0, 0)),       # gamma resident
                pl.BlockSpec((1, embedding), lambda i: (0, 0)),       # beta resident
            ],
            out_specs=pl.BlockSpec((tn, embedding), lambda i: (i, 0)),
        ),
        compiler_params=pltpu.CompilerParams(
            dimension_semantics=("parallel",),   # rows independent; v7x megacore shard
            vmem_limit_bytes=32 * 1024 * 1024,
        ),
    )(x2, weight, b2, g2, be2)

    if n_pad != n:
        out = out[:n]
    return out.reshape(*lead, embedding)


def _reference(x, weight, bias, ln_weight, ln_bias, eps=1e-12):
    h = jnp.einsum("...h,eh->...e", x, weight) + bias
    h = h * 0.5 * (1.0 + lax.erf(h / jnp.sqrt(2.0)))
    mean = jnp.mean(h, axis=-1, keepdims=True)
    var = jnp.mean((h - mean) ** 2, axis=-1, keepdims=True)
    return (h - mean) / jnp.sqrt(var + eps) * ln_weight + ln_bias


if __name__ == "__main__":
    # Small shapes consistent with the module: hidden_size=32, embedding_size=32.
    batch, seq, hidden, embedding = 2, 8, 32, 32
    eps = 1e-12

    key = jax.random.PRNGKey(0)
    kx, kw, kb, kg, kbe = jax.random.split(key, 5)

    x = jax.random.normal(kx, (batch, seq, hidden), dtype=jnp.float32)
    # nn.Linear(hidden_size, embedding_size): weight (embedding, hidden), bias (embedding,)
    weight = jax.random.normal(kw, (embedding, hidden), dtype=jnp.float32) * 0.02
    bias = jax.random.normal(kb, (embedding,), dtype=jnp.float32) * 0.02
    # LayerNorm(embedding_size): perturb deterministically around init values
    ln_weight = jnp.ones((embedding,), jnp.float32) + 0.1 * jax.random.normal(kg, (embedding,), jnp.float32)
    ln_bias = 0.1 * jax.random.normal(kbe, (embedding,), jnp.float32)

    out = albert_prediction_head_transform(x, weight, bias, ln_weight, ln_bias, eps)
    out = jax.block_until_ready(out)

    ref = _reference(x, weight, bias, ln_weight, ln_bias, eps)
    assert out.shape == (batch, seq, embedding)
    assert jnp.allclose(out, ref, atol=1e-5, rtol=1e-5), "mismatch vs reference"

    print("KERNEL_OK")
</pallas_src>

<mosaic_0001>
module attributes {stable_mosaic.version = 11 : i64} {
  func.func @_transform_kernel(%arg0: i32, %arg1: memref<16x32xf32, #tpu.memory_space<vmem>>, %arg2: memref<32x32xf32, #tpu.memory_space<vmem>>, %arg3: memref<1x32xf32, #tpu.memory_space<vmem>>, %arg4: memref<1x32xf32, #tpu.memory_space<vmem>>, %arg5: memref<1x32xf32, #tpu.memory_space<vmem>>, %arg6: memref<16x32xf32, #tpu.memory_space<vmem>>) attributes {dimension_semantics = [#tpu.dimension_semantics<parallel>], iteration_bounds = array<i64: 1>, scalar_prefetch = 0 : i64, scratch_operands = 0 : i64, tpu.core_type = #tpu.core_type<tc>, window_params = [{transform_indices = @transform_0, window_bounds = array<i64: 16, 32>}, {pipeline_mode = #tpu.pipeline_mode<synchronous>, transform_indices = @transform_1, window_bounds = array<i64: 32, 32>}, {pipeline_mode = #tpu.pipeline_mode<synchronous>, transform_indices = @transform_2, window_bounds = array<i64: 1, 32>}, {pipeline_mode = #tpu.pipeline_mode<synchronous>, transform_indices = @transform_3, window_bounds = array<i64: 1, 32>}, {pipeline_mode = #tpu.pipeline_mode<synchronous>, transform_indices = @transform_4, window_bounds = array<i64: 1, 32>}, {transform_indices = @transform_5, window_bounds = array<i64: 16, 32>}]} {
    %c0 = arith.constant 0 : index
    %c0_0 = arith.constant 0 : index
    %0 = vector.load %arg1[%c0, %c0_0] : memref<16x32xf32, #tpu.memory_space<vmem>>, vector<16x32xf32>
    %c0_1 = arith.constant 0 : index
    %c0_2 = arith.constant 0 : index
    %1 = vector.load %arg2[%c0_1, %c0_2] : memref<32x32xf32, #tpu.memory_space<vmem>>, vector<32x32xf32>
    %cst = arith.constant dense<0.000000e+00> : vector<16x32xf32>
    %2 = tpu.matmul %0, %1, %cst {dimension_numbers = #tpu.dot_dimension_numbers<[1], [1], [0], [0], [0, 0, 1, 0], [], []>} : vector<16x32xf32>, vector<32x32xf32>, vector<16x32xf32> -> vector<16x32xf32>
    %c0_3 = arith.constant 0 : index
    %c0_4 = arith.constant 0 : index
    %3 = vector.load %arg3[%c0_3, %c0_4] : memref<1x32xf32, #tpu.memory_space<vmem>>, vector<1x32xf32>
    %4 = vector.broadcast %3 : vector<1x32xf32> to vector<16x32xf32>
    %5 = arith.addf %2, %4 : vector<16x32xf32>
    %cst_5 = arith.constant 5.000000e-01 : f32
    %6 = vector.broadcast %cst_5 : f32 to vector<16x32xf32>
    %7 = arith.mulf %5, %6 : vector<16x32xf32>
    %cst_6 = arith.constant 0.707106769 : f32
    %8 = vector.broadcast %cst_6 : f32 to vector<16x32xf32>
    %9 = arith.mulf %5, %8 : vector<16x32xf32>
    %10 = math.erf %9 : vector<16x32xf32>
    %cst_7 = arith.constant 1.000000e+00 : f32
    %11 = vector.broadcast %cst_7 : f32 to vector<16x32xf32>
    %12 = arith.addf %11, %10 : vector<16x32xf32>
    %13 = arith.mulf %7, %12 : vector<16x32xf32>
    %cst_8 = arith.constant dense<0.000000e+00> : vector<16xf32>
    %14 = vector.multi_reduction <add>, %13, %cst_8 [1] : vector<16x32xf32> to vector<16xf32>
    %15 = vector.shape_cast %14 : vector<16xf32> to vector<16x1xf32>
    %cst_9 = arith.constant 3.125000e-02 : f32
    %16 = vector.broadcast %cst_9 : f32 to vector<16x1xf32>
    %17 = arith.mulf %15, %16 : vector<16x1xf32>
    %18 = vector.broadcast %17 : vector<16x1xf32> to vector<16x32xf32>
    %19 = arith.subf %13, %18 : vector<16x32xf32>
    %20 = arith.mulf %19, %19 : vector<16x32xf32>
    %cst_10 = arith.constant dense<0.000000e+00> : vector<16xf32>
    %21 = vector.multi_reduction <add>, %20, %cst_10 [1] : vector<16x32xf32> to vector<16xf32>
    %22 = vector.shape_cast %21 : vector<16xf32> to vector<16x1xf32>
    %cst_11 = arith.constant 3.125000e-02 : f32
    %23 = vector.broadcast %cst_11 : f32 to vector<16x1xf32>
    %24 = arith.mulf %22, %23 : vector<16x1xf32>
    %cst_12 = arith.constant 9.99999996E-13 : f32
    %25 = vector.broadcast %cst_12 : f32 to vector<16x1xf32>
    %26 = arith.addf %24, %25 : vector<16x1xf32>
    %27 = math.rsqrt %26 : vector<16x1xf32>
    %28 = vector.broadcast %27 : vector<16x1xf32> to vector<16x32xf32>
    %29 = arith.mulf %19, %28 : vector<16x32xf32>
    %c0_13 = arith.constant 0 : index
    %c0_14 = arith.constant 0 : index
    %30 = vector.load %arg4[%c0_13, %c0_14] : memref<1x32xf32, #tpu.memory_space<vmem>>, vector<1x32xf32>
    %31 = vector.broadcast %30 : vector<1x32xf32> to vector<16x32xf32>
    %32 = arith.mulf %29, %31 : vector<16x32xf32>
    %c0_15 = arith.constant 0 : index
    %c0_16 = arith.constant 0 : index
    %33 = vector.load %arg5[%c0_15, %c0_16] : memref<1x32xf32, #tpu.memory_space<vmem>>, vector<1x32xf32>
    %34 = vector.broadcast %33 : vector<1x32xf32> to vector<16x32xf32>
    %35 = arith.addf %32, %34 : vector<16x32xf32>
    %c0_17 = arith.constant 0 : index
    %c0_18 = arith.constant 0 : index
    %36 = vector.load %arg6[%c0_17, %c0_18] : memref<16x32xf32, #tpu.memory_space<vmem>>, vector<16x32xf32>
    tpu.vector_store %arg6[%c0_17, %c0_18], %35 {strides = array<i32>} : memref<16x32xf32, #tpu.memory_space<vmem>>, vector<16x32xf32>,
    return
  }
  func.func @transform_0(%arg0: i32) -> (i32, i32) {
    %c0_i32 = arith.constant 0 : i32
    %c0_i32_0 = arith.constant 0 : i32
    return %arg0, %c0_i32 : i32, i32
  }
  func.func @transform_1(%arg0: i32) -> (i32, i32) {
    %c0_i32 = arith.constant 0 : i32
    %c0_i32_0 = arith.constant 0 : i32
    %c0_i32_1 = arith.constant 0 : i32
    return %c0_i32, %c0_i32_0 : i32, i32
  }
  func.func @transform_2(%arg0: i32) -> (i32, i32) {
    %c0_i32 = arith.constant 0 : i32
    %c0_i32_0 = arith.constant 0 : i32
    %c0_i32_1 = arith.constant 0 : i32
    return %c0_i32, %c0_i32_0 : i32, i32
  }
  func.func @transform_3(%arg0: i32) -> (i32, i32) {
    %c0_i32 = arith.constant 0 : i32
    %c0_i32_0 = arith.constant 0 : i32
    %c0_i32_1 = arith.constant 0 : i32
    return %c0_i32, %c0_i32_0 : i32, i32
  }
  func.func @transform_4(%arg0: i32) -> (i32, i32) {
    %c0_i32 = arith.constant 0 : i32
    %c0_i32_0 = arith.constant 0 : i32
    %c0_i32_1 = arith.constant 0 : i32
    return %c0_i32, %c0_i32_0 : i32, i32
  }
  func.func @transform_5(%arg0: i32) -> (i32, i32) {
    %c0_i32 = arith.constant 0 : i32
    %c0_i32_0 = arith.constant 0 : i32
    return %arg0, %c0_i32 : i32, i32
  }
}

</mosaic_0001>

<llo_original>
// kernel: tpu_custom_call.1
$region0: #{tpu_custom_call.1}
  #allocation0 [shape = 'u32[]', space=smem, size = 0x4, offset = 0x4, fixed_abs, tag = 'smem constant byte address 0x4 - core index']
  #allocation1 [shape = 'u32[144,128]{1,0:T(1,128)}', space=vmem, size = 0x12000, scoped, tag = 'internal scratch']
  %s0 = inlined_call_operand.hbm [shape: f32[16,32], index: 0, kind: input, shape index: {}]
  %s1 = inlined_call_operand.hbm [shape: f32[32,32], index: 1, kind: input, shape index: {}]
  %s2 = inlined_call_operand.vmem [shape: f32[1,32], index: 2, kind: input, shape index: {}]
  %s3 = inlined_call_operand.vmem [shape: f32[1,32], index: 3, kind: input, shape index: {}]
  %s4 = inlined_call_operand.vmem [shape: f32[1,32], index: 4, kind: input, shape index: {}]
  %s5 = inlined_call_operand.hbm [shape: f32[16,32], index: 5, kind: output, shape index: {}]
  %s6 = sld [smem:[#allocation0]]
  $region38: #{tpu_custom_call.1} parent=0
    _
  %s8 = ssub.s32 1, %s6
  %s9 = scalar_select 0, %s8, %s6
  $region1: #{tpu_custom_call.1} parent=0
    #allocation2 [shape = 'u8[8192]{0}', space=vmem, size = 0x2000, scoped, tag = 'input window, operand 0, single buffered']
    #allocation3 [shape = 's32[1]{0}', space=sflag, size = 0x4, scoped, tag = 'scoped memory for tpu_custom_call.1']
    #allocation4 [shape = 's32[1]{0}', space=sflag, size = 0x4, scoped, tag = 'scoped memory for tpu_custom_call.1']
    #allocation5 [shape = 'u8[16384]{0}', space=vmem, size = 0x4000, scoped, tag = 'input window, operand 1, single buffered']
    #allocation6 [shape = 's32[1]{0}', space=sflag, size = 0x4, scoped, tag = 'scoped memory for tpu_custom_call.1']
    #allocation7 [shape = 'u8[8192]{0}', space=vmem, size = 0x2000, scoped, tag = 'output window, operand 0, single buffered']
    %10 = vsyncpa [#allocation3], 0
    %11 = vsyncpa [#allocation6], 0
    %12 = vsyncpa [#allocation4], 0
    // Predicated region
    $region2: #{tpu_custom_call.1} parent=1 // pred_check
      _
    $region3: #{tpu_custom_call.1} parent=1 // pred_check_branch
      %14 = sbr.rel (0) target = $region5
    $region4: #{tpu_custom_call.1} parent=1 // pred_region
      %s16 = ssub.s32 256, 256
      %17 = vsyncadd [#allocation3], %s16
      %s18 = sshll.u32 [#allocation2], 4
      %s19 = int_to_ptr.vmem [resolvable:$true] %s18
      %24 = dma.hbm_to_vmem [thread:$0]  %s0, 256, %s19, [#allocation3], 128, 128, 8
    $region5: #{tpu_custom_call.1} parent=1 // pred_fallthru
      _
    // Predicated region
    $region6: #{tpu_custom_call.1} parent=1 // pred_check
      _
    $region7: #{tpu_custom_call.1} parent=1 // pred_check_branch
      %26 = sbr.rel (0) target = $region9
    $region8: #{tpu_custom_call.1} parent=1 // pred_region
      %s28 = ssub.s32 512, 512
      %29 = vsyncadd [#allocation6], %s28
      %s30 = sshll.u32 [#allocation5], 4
      %s31 = int_to_ptr.vmem [resolvable:$true] %s30
      %36 = dma.hbm_to_vmem [thread:$0]  %s1, 512, %s31, [#allocation6], 128, 128, 8
    $region9: #{tpu_custom_call.1} parent=1 // pred_fallthru
      _
    // Predicated region
    $region10: #{tpu_custom_call.1} parent=1 // pred_check
      _
    $region11: #{tpu_custom_call.1} parent=1 // pred_check_branch
      %38 = sbr.rel (0) target = $region13
    $region12: #{tpu_custom_call.1} parent=1 // pred_region
      _
    $region13: #{tpu_custom_call.1} parent=1 // pred_fallthru
      _
    // Predicated region
    $region14: #{tpu_custom_call.1} parent=1 // pred_check
      _
    $region15: #{tpu_custom_call.1} parent=1 // pred_check_branch
      %40 = sbr.rel (0) target = $region17
    $region16: #{tpu_custom_call.1} parent=1 // pred_region
      _
    $region17: #{tpu_custom_call.1} parent=1 // pred_fallthru
      _
    // Predicated region
    $region18: #{tpu_custom_call.1} parent=1 // pred_check
      _
    $region19: #{tpu_custom_call.1} parent=1 // pred_check_branch
      %42 = sbr.rel (0) target = $region21
    $region20: #{tpu_custom_call.1} parent=1 // pred_region
      _
    $region21: #{tpu_custom_call.1} parent=1 // pred_fallthru
      _
    // Predicated region
    $region22: #{tpu_custom_call.1} parent=1 // pred_check
      _
    $region23: #{tpu_custom_call.1} parent=1 // pred_check_branch
      %44 = sbr.rel (0) target = $region25
    $region24: #{tpu_custom_call.1} parent=1 // pred_region
      %45 = dma.done [#allocation3], 256
    $region25: #{tpu_custom_call.1} parent=1 // pred_fallthru
      _
    // Predicated region
    $region26: #{tpu_custom_call.1} parent=1 // pred_check
      _
    $region27: #{tpu_custom_call.1} parent=1 // pred_check_branch
      %47 = sbr.rel (0) target = $region29
    $region28: #{tpu_custom_call.1} parent=1 // pred_region
      %48 = dma.done [#allocation6], 512
    $region29: #{tpu_custom_call.1} parent=1 // pred_fallthru
      _
    %v49 = vld [vmem:[#allocation2] sm:$0xff]
    %v50 = vld [vmem:[#allocation2 + $0x8] sm:$0xff]
    %v51 = vld [vmem:[#allocation5] sm:$0xff]
    %v52 = vld [vmem:[#allocation5 + $0x8] sm:$0xff]
    %v53 = vld [vmem:[#allocation5 + $0x10] sm:$0xff]
    %v54 = vld [vmem:[#allocation5 + $0x18] sm:$0xff]
    %v55 = vld [vmem:[%s2] sm:$0x1]
    %v57 = vlaneseq
    %v58 = vshrl.u32 %v57, 7
    %v59 = vsub.s32 0, %v58
    %v60 = vrot.slane %v55, %v59
    %vm62 = vcmask 261120
    %v64 = vsel %vm62, %v49, 0
    %v67 = vsel %vm62, %v50, 0
    %v70 = vsel %vm62, %v51, 0
    %v73 = vsel %vm62, %v52, 0
    %v76 = vsel %vm62, %v53, 0
    %v79 = vsel %vm62, %v54, 0
    %81 = vmatprep.subr.mxu0 0.0
    %82 = vmatpush1.xpose.msra.mxu0 %v70
    %83 = vmatprep.subr.mxu0 0.0
    %84 = vmatpush1.xpose.msra.mxu0 %v73
    %85 = vmatprep.subr.mxu0 0.0
    %86 = vmatpush1.xpose.msra.mxu0 %v76
    %87 = vmatprep.subr.mxu0 0.0
    %88 = vmatpush1.xpose.msra.mxu0 %v79
    %89 = vmatprep.subr.mxu0 0.0
    %90 = vmatpush1.xpose.msra.mxu0 0.0
    %91 = vmatprep.subr.mxu0 0.0
    %92 = vmatpush1.xpose.msra.mxu0 0.0
    %93 = vmatprep.subr.mxu0 0.0
    %94 = vmatpush1.xpose.msra.mxu0 0.0
    %95 = vmatprep.subr.mxu0 0.0
    %96 = vmatpush1.xpose.msra.mxu0 0.0
    %97 = vmatprep.subr.mxu0 0.0
    %98 = vmatpush1.xpose.msra.mxu0 0.0
    %99 = vmatprep.subr.mxu0 0.0
    %100 = vmatpush1.xpose.msra.mxu0 0.0
    %101 = vmatprep.subr.mxu0 0.0
    %102 = vmatpush1.xpose.msra.mxu0 0.0
    %103 = vmatprep.subr.mxu0 0.0
    %104 = vmatpush1.xpose.msra.mxu0 0.0
    %105 = vmatprep.subr.mxu0 0.0
    %106 = vmatpush1.xpose.msra.mxu0 0.0
    %107 = vmatprep.subr.mxu0 0.0
    %108 = vmatpush1.xpose.msra.mxu0 0.0
    %109 = vmatprep.subr.mxu0 0.0
    %110 = vmatpush1.xpose.msra.mxu0 0.0
    %111 = vmatprep.subr.mxu0 0.0
    %112 = vmatpush1.xpose.msra.mxu0 0.0
    %113 = vmatprep.subr.mxu0 0.0
    %114 = vmatpush1.xpose.msra.mxu0 0.0
    %115 = vmatprep.subr.mxu0 0.0
    %116 = vmatpush1.xpose.msra.mxu0 0.0
    %117 = vmatprep.subr.mxu0 0.0
    %118 = vmatpush1.xpose.msra.mxu0 0.0
    %119 = vmatprep.subr.mxu0 0.0
    %120 = vmatpush1.xpose.msra.mxu0 0.0
    %121 = vmatprep.subr.mxu0 0.0
    %122 = vmatpush1.xpose.msra.mxu0 0.0
    %123 = vmatprep.subr.mxu0 0.0
    %124 = vmatpush1.xpose.msra.mxu0 0.0
    %125 = vmatprep.subr.mxu0 0.0
    %126 = vmatpush1.xpose.msra.mxu0 0.0
    %127 = vmatprep.subr.mxu0 0.0
    %128 = vmatpush1.xpose.msra.mxu0 0.0
    %129 = vmatprep.subr.mxu0 0.0
    %130 = vmatpush1.xpose.msra.mxu0 0.0
    %131 = vmatprep.subr.mxu0 0.0
    %132 = vmatpush1.xpose.msra.mxu0 0.0
    %133 = vmatprep.subr.mxu0 0.0
    %134 = vmatpush1.xpose.msra.mxu0 0.0
    %135 = vmatprep.subr.mxu0 0.0
    %136 = vmatpush1.xpose.msra.mxu0 0.0
    %137 = vmatprep.subr.mxu0 0.0
    %138 = vmatpush1.xpose.msra.mxu0 0.0
    %139 = vmatprep.subr.mxu0 0.0
    %140 = vmatpush1.xpose.msra.mxu0 0.0
    %141 = vmatprep.subr.mxu0 0.0
    %142 = vmatpush1.xpose.msra.mxu0 0.0
    %143 = vmatprep.subr.mxu0 0.0
    %144 = vmatpush1.xpose.msra.mxu0 0.0
    %145 = vmatprep.mubr.f32.mxu0 0.0
    %146 = vmatmul.mubr.f32.gmra.mrb[0].mxu0 %v64
    %v147 = vpop.f32.mrb[0].mxu0
    %v148 = vadd.f32 %v60, %v147
    %v149 = vpop.f32.mrb[0].mxu0
    %150 = vmatprep.mubr.f32.mxu0 0.0
    %151 = vmatmul.mubr.f32.gmra.mrb[0].mxu0 %v67
    %v152 = vpop.f32.mrb[0].mxu0
    %v153 = vadd.f32 %v60, %v152
    %v154 = vpop.f32.mrb[0].mxu0
    %155 = vdwg.mxu0
    %v156 = vmul.f32 %v148, 0.5
    %v157 = vmul.f32 %v153, 0.5
    %v158 = vmul.f32 %v148, 0.70710677
    %v159 = vmul.f32 %v153, 0.70710677
    %v160 = verf.f32.pop %v158
    %v161 = verf.f32.pop %v159
    %v162 = vadd.f32 %v160, 1.0
    %v163 = vadd.f32 %v161, 1.0
    %v164 = vmul.f32 %v156, %v162
    %v165 = vmul.f32 %v157, %v163
    %v166 = vsel %vm62, %v164, 0.0
    %167 = vadd.xlane.f32.xlu0 %v166
    %v168 = vpop.xlane.xlu0 %167
    %v169 = vsel %vm62, %v165, 0.0
    %170 = vadd.xlane.f32.xlu0 %v169
    %v171 = vpop.xlane.xlu0 %170
    %v172 = vmul.f32 %v168, 0.03125
    %v173 = vmul.f32 %v171, 0.03125
    %v174 = vsub.f32 %v164, %v172
    %v175 = vsub.f32 %v165, %v173
    %v176 = vmul.f32 %v174, %v174
    %v177 = vmul.f32 %v175, %v175
    %v178 = vsel %vm62, %v176, 0.0
    %179 = vadd.xlane.f32.xlu0 %v178
    %v180 = vpop.xlane.xlu0 %179
    %v181 = vsel %vm62, %v177, 0.0
    %182 = vadd.xlane.f32.xlu0 %v181
    %v183 = vpop.xlane.xlu0 %182
    %v184 = vmul.f32 %v180, 0.03125
    %v185 = vmul.f32 %v183, 0.03125
    %v186 = vadd.f32 %v184, 1e-12
    %v187 = vadd.f32 %v185, 1e-12
    %v188 = vrsqrt.pop %v186
    %v189 = vrsqrt.pop %v187
    %v190 = vmul.f32 %v174, %v188
    %v191 = vmul.f32 %v175, %v189
    %v192 = vld [vmem:[%s3] sm:$0x1]
    %v194 = vlaneseq
    %v195 = vshrl.u32 %v194, 7
    %v196 = vsub.s32 0, %v195
    %v197 = vrot.slane %v192, %v196
    %v199 = vmul.f32 %v190, %v197
    %v200 = vmul.f32 %v191, %v197
    %v201 = vld [vmem:[%s4] sm:$0x1]
    %v203 = vlaneseq
    %v204 = vshrl.u32 %v203, 7
    %v205 = vsub.s32 0, %v204
    %v206 = vrot.slane %v201, %v205
    %v208 = vadd.f32 %v199, %v206
    %v209 = vadd.f32 %v200, %v206
    %210 = vst.msk [vmem:[#allocation7] sm:$0xff] %vm62, %v208
    %211 = vst.msk [vmem:[#allocation7 + $0x8] sm:$0xff] %vm62, %v209
    // Predicated region
    $region30: #{tpu_custom_call.1} parent=1 // pred_check
      _
    $region31: #{tpu_custom_call.1} parent=1 // pred_check_branch
      %213 = sbr.rel (0) target = $region33
    $region32: #{tpu_custom_call.1} parent=1 // pred_region
      %s215 = ssub.s32 256, 256
      %216 = vsyncadd [#allocation4], %s215
      %s217 = sshll.u32 [#allocation7], 4
      %s218 = int_to_ptr.vmem [resolvable:$true] %s217
      %223 = dma.vmem_to_hbm [thread:$0]  %s218, 256, %s5, [#allocation4], 128, 128, 8
    $region33: #{tpu_custom_call.1} parent=1 // pred_fallthru
      _
    // Predicated region
    $region34: #{tpu_custom_call.1} parent=1 // pred_check
      _
    $region35: #{tpu_custom_call.1} parent=1 // pred_check_branch
      %225 = sbr.rel (0) target = $region37
    $region36: #{tpu_custom_call.1} parent=1 // pred_region
      %226 = dma.done [#allocation4], 256
    $region37: #{tpu_custom_call.1} parent=1 // pred_fallthru
      _
    %227 = vsyncpa [#allocation3], 1
    %228 = vsyncpa [#allocation6], 1
    %229 = vsyncpa [#allocation4], 1

</llo_original>
